<compile_context>
chip_gen: v6e
topology: v6e:2x2x1
jax: 0.10.0
libtpu: 0.0.40
codegen_flags: <defaults>
</compile_context>

<pallas_src>
import jax
import jax.numpy as jnp
from jax.experimental import pallas as pl
from jax.experimental.pallas import tpu as pltpu


def _softplus(z):
    # numerically-stable softplus matching torch.nn.functional.softplus
    # (threshold=20: returns z directly for large z)
    return jnp.where(z > 20.0, z, jnp.log1p(jnp.exp(jnp.minimum(z, 20.0))))


def _epilogue(z):
    # z: (4, tb) f32, rows = [mu, logv, logalpha, logbeta]
    # row 0: identity; rows 1,3: softplus; row 2: softplus + 1
    sp = _softplus(z)
    row = jax.lax.broadcasted_iota(jnp.int32, z.shape, 0)
    return jnp.where(row == 0, z, sp + (row == 2).astype(jnp.float32))


def _dng_dot(wt, x):
    # (4, tk) · (tb, tk) contracting the shared K axis -> (4, tb)  (q·kᵀ form)
    return jax.lax.dot_general(
        wt, x,
        dimension_numbers=(((1,), (1,)), ((), ())),
        preferred_element_type=jnp.float32,
    )


def _dng_kernel_single(x_ref, wt_ref, b_ref, o_ref):
    # Fast path: whole D in one slab, no accumulator scratch.
    z = _dng_dot(wt_ref[...], x_ref[...]) + b_ref[...]
    o_ref[...] = _epilogue(z)


def _dng_kernel_acc(x_ref, wt_ref, b_ref, o_ref, acc_ref):
    k = pl.program_id(1)

    @pl.when(k == 0)
    def _init():
        # fold the bias into the accumulator init (no extra epilogue add)
        acc_ref[...] = jnp.broadcast_to(b_ref[...], acc_ref.shape)

    acc_ref[...] += _dng_dot(wt_ref[...], x_ref[...])

    @pl.when(k == pl.num_programs(1) - 1)
    def _finalize():
        o_ref[...] = _epilogue(acc_ref[...])


def _vmem_limit_bytes():
    try:
        cap = int(pltpu.get_tpu_info().vmem_capacity_bytes)
    except Exception:
        cap = 64 * 1024 * 1024  # conservative fallback (v7x per-TC physical)
    # v7x (64 MiB) -> 48 MiB; v5e/v6e (128 MiB) -> 64 MiB
    return int(min((cap * 3) // 4, 64 * 1024 * 1024))


def dense_normal_gamma(x, w, b, *, tb=None, tk=None):
    """x: (B, size_in); w: (size_in, 4); b: (4,)  ->  (B, 4) float32."""
    B, D = x.shape
    assert w.shape == (D, 4), w.shape
    assert b.shape == (4,), b.shape

    # Keep x in its incoming dtype (bf16 halves the HBM traffic of the
    # mem-bound read).  The tiny weight is cast to match and transposed once so
    # its VMEM block is lane-dense along K.
    wt = jnp.asarray(w).astype(x.dtype).T               # (4, D)
    b_col = jnp.asarray(b).astype(jnp.float32).reshape(4, 1)
    itemsize = jnp.dtype(x.dtype).itemsize

    vmem_limit = _vmem_limit_bytes()
    x_budget = vmem_limit // 5     # per x buffer (double-buffered + w/acc/out)

    # ---- K tile: keep full D unless a ~256-row full-D slab overflows budget ----
    if tk is None:
        tk = D
        if D % 128 == 0 and 256 * D * itemsize > x_budget:
            max_tk = max(128, ((x_budget // (256 * itemsize)) // 128) * 128)
            best, cand = 128, 128
            while cand <= min(max_tk, D):
                if D % cand == 0:
                    best = cand
                cand += 128
            tk = best
    if tk != D and not (D % tk == 0 and tk % 128 == 0):
        raise ValueError(f"tk={tk} must be a 128-multiple divisor of D={D}")
    nk = 1 if tk == D else D // tk

    # ---- batch tile: fill the budget, lane-dense (128-multiple), >=2 steps ----
    if tb is None:
        if B < 256:
            tb = B
        else:
            rows = x_budget // max(1, itemsize * tk)
            tb = max(128, (rows // 128) * 128)
            # ensure >= 2 batch grid steps (v7x dual-TC); harmless on 1-TC chips
            half = ((pl.cdiv(B, 2) + 127) // 128) * 128
            tb = min(tb, half)
    if not (tb == B or tb % 128 == 0):
        raise ValueError(f"tb={tb} must equal B or be a multiple of 128")
    nb = pl.cdiv(B, tb)   # ragged last block is masked by Pallas

    cost = pl.CostEstimate(
        flops=2 * B * D * 4,
        transcendentals=8 * B,
        bytes_accessed=B * D * itemsize + 4 * D * itemsize + 4 * B * 4 + 16,
    )

    if nk == 1:
        grid = (nb,)
        in_specs = [
            pl.BlockSpec((tb, tk), lambda i: (i, 0)),   # x tile
            pl.BlockSpec((4, tk), lambda i: (0, 0)),    # w^T (full D slab)
            pl.BlockSpec((4, 1), lambda i: (0, 0)),     # bias column
        ]
        out_specs = pl.BlockSpec((4, tb), lambda i: (0, i))
        scratch_shapes = []
        kernel = _dng_kernel_single
        dim_sem = ("parallel",)
    else:
        grid = (nb, nk)
        in_specs = [
            pl.BlockSpec((tb, tk), lambda i, k: (i, k)),
            pl.BlockSpec((4, tk), lambda i, k: (0, k)),
            pl.BlockSpec((4, 1), lambda i, k: (0, 0)),
        ]
        out_specs = pl.BlockSpec((4, tb), lambda i, k: (0, i))
        scratch_shapes = [pltpu.VMEM((4, tb), jnp.float32)]
        kernel = _dng_kernel_acc
        dim_sem = ("parallel", "arbitrary")

    out_t = pl.pallas_call(
        kernel,
        out_shape=jax.ShapeDtypeStruct((4, B), jnp.float32),
        grid_spec=pltpu.PrefetchScalarGridSpec(
            num_scalar_prefetch=0,
            grid=grid,
            in_specs=in_specs,
            out_specs=out_specs,
            scratch_shapes=scratch_shapes,
        ),
        compiler_params=pltpu.CompilerParams(
            dimension_semantics=dim_sem,
            vmem_limit_bytes=vmem_limit,
        ),
        cost_estimate=cost,
    )(x, wt, b_col)

    return out_t.T   # (B, 4) float32; tiny caller-side transpose


def dense_normal_gamma_ref(x, w, b):
    out = x.astype(jnp.float32) @ w.astype(jnp.float32) + b.astype(jnp.float32)
    mu = out[:, 0:1]
    v = jax.nn.softplus(out[:, 1:2])
    alpha = jax.nn.softplus(out[:, 2:3]) + 1.0
    beta = jax.nn.softplus(out[:, 3:4])
    return jnp.concatenate([mu, v, alpha, beta], axis=-1)


if __name__ == "__main__":
    key = jax.random.PRNGKey(0)
    keys = jax.random.split(key, 9)

    # ---- case 1: module-consistent small shape (batch=8, size_in=32), f32 ----
    batch, size_in = 8, 32
    bound = 1.0 / (size_in ** 0.5)   # nn.Linear-style uniform init
    w = jax.random.uniform(keys[0], (size_in, 4), jnp.float32, -bound, bound)
    b = jax.random.uniform(keys[1], (4,), jnp.float32, -bound, bound)
    x = jax.random.normal(keys[2], (batch, size_in), jnp.float32)

    out = jax.block_until_ready(dense_normal_gamma(x, w, b))
    ref = dense_normal_gamma_ref(x, w, b)
    assert out.shape == (batch, 4) and out.dtype == jnp.float32
    assert jnp.allclose(out, ref, atol=1e-5, rtol=1e-5), (out, ref)
    assert bool(jnp.all(out[:, 1] > 0.0))   # v > 0
    assert bool(jnp.all(out[:, 2] > 1.0))   # alpha > 1
    assert bool(jnp.all(out[:, 3] > 0.0))   # beta > 0

    # ---- case 2: batch tiling + K accumulation path (grid (2, 2)) ----
    B2, D2 = 256, 256
    bound2 = 1.0 / (D2 ** 0.5)
    w2 = jax.random.uniform(keys[3], (D2, 4), jnp.float32, -bound2, bound2)
    b2 = jax.random.uniform(keys[4], (4,), jnp.float32, -bound2, bound2)
    x2 = jax.random.normal(keys[5], (B2, D2), jnp.float32)

    out2 = jax.block_until_ready(dense_normal_gamma(x2, w2, b2, tb=128, tk=128))
    ref2 = dense_normal_gamma_ref(x2, w2, b2)
    assert jnp.allclose(out2, ref2, atol=1e-4, rtol=1e-4)

    # ---- case 3: bf16 input + ragged batch (cdiv grid, masked last block) ----
    B3, D3 = 200, 384
    bound3 = 1.0 / (D3 ** 0.5)
    w3 = jax.random.uniform(keys[6], (D3, 4), jnp.float32, -bound3, bound3)
    b3 = jax.random.uniform(keys[7], (4,), jnp.float32, -bound3, bound3)
    x3 = jax.random.normal(keys[8], (B3, D3), jnp.float32).astype(jnp.bfloat16)

    out3 = jax.block_until_ready(dense_normal_gamma(x3, w3, b3, tb=128))
    ref3 = dense_normal_gamma_ref(x3, w3.astype(jnp.bfloat16), b3)
    assert out3.dtype == jnp.float32
    assert jnp.allclose(out3, ref3, atol=1e-2, rtol=1e-2)

    print("KERNEL_OK")
</pallas_src>

<mosaic_0001>
module attributes {stable_mosaic.version = 11 : i64} {
  func.func @_dng_kernel_single(%arg0: i32, %arg1: memref<8x32xf32, #tpu.memory_space<vmem>>, %arg2: memref<4x32xf32, #tpu.memory_space<vmem>>, %arg3: memref<4x1xf32, #tpu.memory_space<vmem>>, %arg4: memref<4x8xf32, #tpu.memory_space<vmem>>) attributes {dimension_semantics = [#tpu.dimension_semantics<parallel>], iteration_bounds = array<i64: 1>, scalar_prefetch = 0 : i64, scratch_operands = 0 : i64, tpu.core_type = #tpu.core_type<tc>, window_params = [{transform_indices = @transform_0, window_bounds = array<i64: 8, 32>}, {pipeline_mode = #tpu.pipeline_mode<synchronous>, transform_indices = @transform_1, window_bounds = array<i64: 4, 32>}, {pipeline_mode = #tpu.pipeline_mode<synchronous>, transform_indices = @transform_2, window_bounds = array<i64: 4, 1>}, {transform_indices = @transform_3, window_bounds = array<i64: 4, 8>}]} {
    %c0 = arith.constant 0 : index
    %c0_0 = arith.constant 0 : index
    %0 = vector.load %arg2[%c0, %c0_0] : memref<4x32xf32, #tpu.memory_space<vmem>>, vector<4x32xf32>
    %c0_1 = arith.constant 0 : index
    %c0_2 = arith.constant 0 : index
    %1 = vector.load %arg1[%c0_1, %c0_2] : memref<8x32xf32, #tpu.memory_space<vmem>>, vector<8x32xf32>
    %cst = arith.constant dense<0.000000e+00> : vector<4x8xf32>
    %2 = tpu.matmul %0, %1, %cst {dimension_numbers = #tpu.dot_dimension_numbers<[1], [1], [0], [0], [0, 0, 1, 0], [], []>} : vector<4x32xf32>, vector<8x32xf32>, vector<4x8xf32> -> vector<4x8xf32>
    %c0_3 = arith.constant 0 : index
    %c0_4 = arith.constant 0 : index
    %3 = vector.load %arg3[%c0_3, %c0_4] : memref<4x1xf32, #tpu.memory_space<vmem>>, vector<4x1xf32>
    %4 = vector.broadcast %3 : vector<4x1xf32> to vector<4x8xf32>
    %5 = arith.addf %2, %4 : vector<4x8xf32>
    %cst_5 = arith.constant 2.000000e+01 : f32
    %6 = vector.broadcast %cst_5 : f32 to vector<4x8xf32>
    %7 = arith.cmpf ogt, %5, %6 : vector<4x8xf32>
    %cst_6 = arith.constant 2.000000e+01 : f32
    %8 = vector.broadcast %cst_6 : f32 to vector<4x8xf32>
    %9 = arith.minimumf %5, %8 : vector<4x8xf32>
    %10 = math.exp %9 : vector<4x8xf32>
    %11 = math.log1p %10 : vector<4x8xf32>
    %12 = arith.select %7, %5, %11 : vector<4x8xi1>, vector<4x8xf32>
    %13 = tpu.iota {dimensions = array<i32: 0>} : vector<4x8xi32>
    %c0_i32 = arith.constant 0 : i32
    %14 = vector.broadcast %c0_i32 : i32 to vector<4x8xi32>
    %15 = arith.cmpi eq, %13, %14 : vector<4x8xi32>
    %c2_i32 = arith.constant 2 : i32
    %16 = vector.broadcast %c2_i32 : i32 to vector<4x8xi32>
    %17 = arith.cmpi eq, %13, %16 : vector<4x8xi32>
    %18 = arith.extui %17 : vector<4x8xi1> to vector<4x8xi32>
    %19 = arith.sitofp %18 : vector<4x8xi32> to vector<4x8xf32>
    %20 = arith.addf %12, %19 : vector<4x8xf32>
    %21 = arith.select %15, %5, %20 : vector<4x8xi1>, vector<4x8xf32>
    %c0_7 = arith.constant 0 : index
    %c0_8 = arith.constant 0 : index
    %22 = vector.load %arg4[%c0_7, %c0_8] : memref<4x8xf32, #tpu.memory_space<vmem>>, vector<4x8xf32>
    tpu.vector_store %arg4[%c0_7, %c0_8], %21 {strides = array<i32>} : memref<4x8xf32, #tpu.memory_space<vmem>>, vector<4x8xf32>,
    return
  }
  func.func @transform_0(%arg0: i32) -> (i32, i32) {
    %c0_i32 = arith.constant 0 : i32
    %c0_i32_0 = arith.constant 0 : i32
    return %arg0, %c0_i32 : i32, i32
  }
  func.func @transform_1(%arg0: i32) -> (i32, i32) {
    %c0_i32 = arith.constant 0 : i32
    %c0_i32_0 = arith.constant 0 : i32
    %c0_i32_1 = arith.constant 0 : i32
    return %c0_i32, %c0_i32_0 : i32, i32
  }
  func.func @transform_2(%arg0: i32) -> (i32, i32) {
    %c0_i32 = arith.constant 0 : i32
    %c0_i32_0 = arith.constant 0 : i32
    %c0_i32_1 = arith.constant 0 : i32
    return %c0_i32, %c0_i32_0 : i32, i32
  }
  func.func @transform_3(%arg0: i32) -> (i32, i32) {
    %c0_i32 = arith.constant 0 : i32
    %c0_i32_0 = arith.constant 0 : i32
    return %c0_i32, %arg0 : i32, i32
  }
}

</mosaic_0001>

<llo_original>
// kernel: tpu_custom_call.1
$region0: #{tpu_custom_call.1}
  #allocation0 [shape = 'u32[]', space=smem, size = 0x4, offset = 0x4, fixed_abs, tag = 'smem constant byte address 0x4 - core index']
  #allocation1 [shape = 'u32[144,128]{1,0:T(1,128)}', space=vmem, size = 0x12000, scoped, tag = 'internal scratch']
  %s0 = inlined_call_operand.hbm [shape: f32[8,32], index: 0, kind: input, shape index: {}]
  %s1 = inlined_call_operand.vmem [shape: f32[4,32], index: 1, kind: input, shape index: {}]
  %s2 = inlined_call_operand.vmem [shape: f32[4,1], index: 2, kind: input, shape index: {}]
  %s3 = inlined_call_operand.hbm [shape: f32[4,8], index: 3, kind: output, shape index: {}]
  %s4 = sld [smem:[#allocation0]]
  $region26: #{tpu_custom_call.1} parent=0
    _
  %s6 = ssub.s32 1, %s4
  %s7 = scalar_select 0, %s6, %s4
  $region1: #{tpu_custom_call.1} parent=0
    #allocation2 [shape = 'u8[4096]{0}', space=vmem, size = 0x1000, scoped, tag = 'input window, operand 0, single buffered']
    #allocation3 [shape = 's32[1]{0}', space=sflag, size = 0x4, scoped, tag = 'scoped memory for tpu_custom_call.1']
    #allocation4 [shape = 's32[1]{0}', space=sflag, size = 0x4, scoped, tag = 'scoped memory for tpu_custom_call.1']
    #allocation5 [shape = 'u8[2048]{0}', space=vmem, size = 0x800, scoped, tag = 'output window, operand 0, single buffered']
    %8 = vsyncpa [#allocation3], 0
    %9 = vsyncpa [#allocation4], 0
    // Predicated region
    $region2: #{tpu_custom_call.1} parent=1 // pred_check
      _
    $region3: #{tpu_custom_call.1} parent=1 // pred_check_branch
      %11 = sbr.rel (0) target = $region5
    $region4: #{tpu_custom_call.1} parent=1 // pred_region
      %s13 = ssub.s32 128, 128
      %14 = vsyncadd [#allocation3], %s13
      %s16 = sshll.u32 [#allocation2], 4
      %s17 = int_to_ptr.vmem [resolvable:$true] %s16
      %19 = dma.hbm_to_vmem [thread:$0]  %s0, 128, %s17, [#allocation3]
    $region5: #{tpu_custom_call.1} parent=1 // pred_fallthru
      _
    // Predicated region
    $region6: #{tpu_custom_call.1} parent=1 // pred_check
      _
    $region7: #{tpu_custom_call.1} parent=1 // pred_check_branch
      %21 = sbr.rel (0) target = $region9
    $region8: #{tpu_custom_call.1} parent=1 // pred_region
      _
    $region9: #{tpu_custom_call.1} parent=1 // pred_fallthru
      _
    // Predicated region
    $region10: #{tpu_custom_call.1} parent=1 // pred_check
      _
    $region11: #{tpu_custom_call.1} parent=1 // pred_check_branch
      %23 = sbr.rel (0) target = $region13
    $region12: #{tpu_custom_call.1} parent=1 // pred_region
      _
    $region13: #{tpu_custom_call.1} parent=1 // pred_fallthru
      _
    // Predicated region
    $region14: #{tpu_custom_call.1} parent=1 // pred_check
      _
    $region15: #{tpu_custom_call.1} parent=1 // pred_check_branch
      %25 = sbr.rel (0) target = $region17
    $region16: #{tpu_custom_call.1} parent=1 // pred_region
      %26 = dma.done [#allocation3], 128
    $region17: #{tpu_custom_call.1} parent=1 // pred_fallthru
      _
    %v27 = vld [vmem:[%s1] sm:$0xf]
    %v28 = vld [vmem:[#allocation2] sm:$0xff]
    %v29 = vld [vmem:[%s2] sm:$0xf]
    %31 = vset.pattern.permute.xlu0 0
    %32 = vperm.xlu0 %31, %v29
    %v33 = vpop.permute.xlu0 %32
    %vm35 = vcmask 261120
    %v37 = vsel %vm35, %v27, 0
    %v40 = vsel %vm35, %v28, 0
    %42 = vmatprep.subr.mxu0 0.0
    %43 = vmatpush1.xpose.msra.mxu0 0.0
    %44 = vmatprep.subr.mxu0 0.0
    %45 = vmatpush1.xpose.msra.mxu0 0.0
    %46 = vmatprep.subr.mxu0 0.0
    %47 = vmatpush1.xpose.msra.mxu0 0.0
    %48 = vmatprep.subr.mxu0 0.0
    %49 = vmatpush1.xpose.msra.mxu0 0.0
    %50 = vmatprep.subr.mxu0 0.0
    %51 = vmatpush1.xpose.msra.mxu0 0.0
    %52 = vmatprep.subr.mxu0 0.0
    %53 = vmatpush1.xpose.msra.mxu0 0.0
    %54 = vmatprep.subr.mxu0 0.0
    %55 = vmatpush1.xpose.msra.mxu0 0.0
    %56 = vmatprep.subr.mxu0 0.0
    %57 = vmatpush1.xpose.msra.mxu0 0.0
    %58 = vmatprep.subr.mxu0 0.0
    %59 = vmatpush1.xpose.msra.mxu0 0.0
    %60 = vmatprep.subr.mxu0 0.0
    %61 = vmatpush1.xpose.msra.mxu0 0.0
    %62 = vmatprep.subr.mxu0 0.0
    %63 = vmatpush1.xpose.msra.mxu0 0.0
    %64 = vmatprep.subr.mxu0 0.0
    %65 = vmatpush1.xpose.msra.mxu0 0.0
    %66 = vmatprep.subr.mxu0 0.0
    %67 = vmatpush1.xpose.msra.mxu0 0.0
    %68 = vmatprep.subr.mxu0 0.0
    %69 = vmatpush1.xpose.msra.mxu0 0.0
    %70 = vmatprep.subr.mxu0 0.0
    %71 = vmatpush1.xpose.msra.mxu0 0.0
    %72 = vmatprep.subr.mxu0 0.0
    %73 = vmatpush1.xpose.msra.mxu0 %v40
    %74 = vmatprep.subr.mxu0 0.0
    %75 = vmatpush2.xpose.msra.mxu0 0.0
    %76 = vmatprep.subr.mxu0 0.0
    %77 = vmatpush2.xpose.msra.mxu0 0.0
    %78 = vmatprep.subr.mxu0 0.0
    %79 = vmatpush2.xpose.msra.mxu0 0.0
    %80 = vmatprep.subr.mxu0 0.0
    %81 = vmatpush2.xpose.msra.mxu0 0.0
    %82 = vmatprep.subr.mxu0 0.0
    %83 = vmatpush2.xpose.msra.mxu0 0.0
    %84 = vmatprep.subr.mxu0 0.0
    %85 = vmatpush2.xpose.msra.mxu0 0.0
    %86 = vmatprep.subr.mxu0 0.0
    %87 = vmatpush2.xpose.msra.mxu0 0.0
    %88 = vmatprep.subr.mxu0 0.0
    %89 = vmatpush2.xpose.msra.mxu0 0.0
    %90 = vmatprep.subr.mxu0 0.0
    %91 = vmatpush2.xpose.msra.mxu0 0.0
    %92 = vmatprep.subr.mxu0 0.0
    %93 = vmatpush2.xpose.msra.mxu0 0.0
    %94 = vmatprep.subr.mxu0 0.0
    %95 = vmatpush2.xpose.msra.mxu0 0.0
    %96 = vmatprep.subr.mxu0 0.0
    %97 = vmatpush2.xpose.msra.mxu0 0.0
    %98 = vmatprep.subr.mxu0 0.0
    %99 = vmatpush2.xpose.msra.mxu0 0.0
    %100 = vmatprep.subr.mxu0 0.0
    %101 = vmatpush2.xpose.msra.mxu0 0.0
    %102 = vmatprep.subr.mxu0 0.0
    %103 = vmatpush2.xpose.msra.mxu0 0.0
    %104 = vmatprep.subr.mxu0 0.0
    %105 = vmatpush2.xpose.msra.mxu0 0.0
    %106 = vmatprep.mubr.f32.mxu0 0.0
    %107 = vmatmul.mubr.f32.gmra.mxu0 %v37
    %v108 = vpop.f32.mrf.mxu0
    %v109 = vadd.f32 %v33, %v108
    %v110 = vpop.f32.mrf.mxu0
    %111 = vdwg.mxu0
    %vm112 = vcmp.gt.f32.partialorder %v109, 20.0
    %v113 = vmin.f32 %v109, 20.0
    %v114 = vmul.f32 %v113, 1.442695
    %v115 = vpow.pop %v114
    %v116 = vadd.f32 %v115, 1.0
    %v117 = vlog2.pop %v116
    %v118 = vmul.f32 %v117, 0.6931472
    %v119 = vmul.f32 -0.5, %v115
    %v120 = vadd.f32 %v119, 1.0
    %v121 = vmul.f32 %v120, %v115
    %v122 = vand.u32 2147483647, %v115
    %vm123 = vcmp.lt.f32.partialorder %v122, 0.0004427343
    %v124 = vsel %vm123, %v121, %v118
    %v125 = vsel %vm112, %v109, %v124
    %v126 = vlaneseq
    %v127 = vshrl.u32 %v126, 7
    %vm128 = vcmp.eq.s32.totalorder %v127, 0
    %vm129 = vcmp.eq.s32.totalorder %v127, 2
    %v130 = vsel %vm129, 1, 0
    %v131 = vcvt.s32.f32 %v130
    %v132 = vadd.f32 %v125, %v131
    %v133 = vsel %vm128, %v109, %v132
    %vm134 = vcmask 60416
    %135 = vst.msk [vmem:[#allocation5] sm:$0xf] %vm134, %v133
    // Predicated region
    $region18: #{tpu_custom_call.1} parent=1 // pred_check
      _
    $region19: #{tpu_custom_call.1} parent=1 // pred_check_branch
      %137 = sbr.rel (0) target = $region21
    $region20: #{tpu_custom_call.1} parent=1 // pred_region
      %s139 = ssub.s32 64, 64
      %140 = vsyncadd [#allocation4], %s139
      %s142 = sshll.u32 [#allocation5], 4
      %s143 = int_to_ptr.vmem [resolvable:$true] %s142
      %145 = dma.vmem_to_hbm [thread:$0]  %s143, 64, %s3, [#allocation4]
    $region21: #{tpu_custom_call.1} parent=1 // pred_fallthru
      _
    // Predicated region
    $region22: #{tpu_custom_call.1} parent=1 // pred_check
      _
    $region23: #{tpu_custom_call.1} parent=1 // pred_check_branch
      %147 = sbr.rel (0) target = $region25
    $region24: #{tpu_custom_call.1} parent=1 // pred_region
      %148 = dma.done [#allocation4], 64
    $region25: #{tpu_custom_call.1} parent=1 // pred_fallthru
      _
    %149 = vsyncpa [#allocation3], 1
    %150 = vsyncpa [#allocation4], 1

</llo_original>
